<compile_context>
chip_gen: v7x
topology: tpu7x:2x2x1
jax: 0.10.0
libtpu: 0.0.40
codegen_flags: <defaults>
</compile_context>

<pallas_src>
import math

import jax
import jax.numpy as jnp
from jax import lax
from jax.experimental import pallas as pl
from jax.experimental.pallas import tpu as pltpu


def _prep_slab(x, max_tile_rows):
    """Flatten `x` into a lane-dense (rows, 128) slab, zero-padded so that
    rows == tile * tiles.  Returns (slab, tile_rows, num_tiles)."""
    total = math.prod(x.shape)
    itemsize = int(jnp.dtype(x.dtype).itemsize)
    sub = max(8, 32 // max(1, itemsize))          # sublane multiple per dtype
    max_tile = max(int(max_tile_rows), sub)

    rows = -(-total // 128)                       # ceil
    tiles = max(1, -(-rows // max_tile))          # number of grid tiles
    tile = -(-rows // tiles)                      # rows per tile (balanced)
    tile = -(-tile // sub) * sub                  # round up to sublane multiple
    rows_padded = tile * tiles
    padded_total = rows_padded * 128

    flat = x.reshape(-1)
    if padded_total != total:
        flat = jnp.pad(flat, (0, padded_total - total))   # zeros are neutral
    return flat.reshape(rows_padded, 128), tile, tiles


def generator_loss3(logits, pattn, rec_target, rec_pred, target,
                    beta=5e-05, gamma=0.005, sigma=1.0,
                    max_tile_rows=8192):
    """Pallas implementation of Generator_loss3.forward(output, target).

    logits     : (N, C)  -- output[0]
    pattn      : any     -- output[2] (attention pattern)
    rec_target : any     -- output[3]
    rec_pred   : any     -- output[4] (same shape as output[3])
    target     : (N,)    -- int class indices
    """
    assert rec_target.shape == rec_pred.shape, "MSE inputs must match"

    # The whole (N, C) logits block stays resident in VMEM for the CE step.
    # TODO(synk): tile CE over the class dim (online logsumexp) for huge vocab heads.
    assert logits.size * int(jnp.dtype(logits.dtype).itemsize) <= 16 * 2**20, (
        "logits too large to keep resident in VMEM; tile the CE computation")

    # --- lane-dense, tile-aligned slabs (zero padding, neutral for the sums) ---
    pattn2d, p_tile, p_tiles = _prep_slab(pattn, max_tile_rows)
    reca2d, r_tile, r_tiles = _prep_slab(rec_pred, max_tile_rows)
    recb2d, _, _ = _prep_slab(rec_target, max_tile_rows)
    target2d = target.astype(jnp.int32).reshape(-1, 1)

    grid_t = max(p_tiles, r_tiles)
    rec_count = math.prod(rec_pred.shape)       # original (unpadded) count
    n_batch = logits.shape[0]

    def kernel(pattn_ref, ra_ref, rb_ref, logits_ref, target_ref, out_ref,
               att_acc, rec_acc):
        i = pl.program_id(0)

        @pl.when(i == 0)
        def _init():
            att_acc[...] = jnp.zeros_like(att_acc)
            rec_acc[...] = jnp.zeros_like(rec_acc)

        # ---- Latt: attention-pattern partial sums (sublane reduce only) ----
        def _acc_att():
            tile = pattn_ref[...].astype(jnp.float32)
            att_acc[...] += jnp.sum(tile, axis=0, keepdims=True)

        # ---- Lrec numerator: squared-difference partial sums ----
        def _acc_rec():
            d = ra_ref[...].astype(jnp.float32) - rb_ref[...].astype(jnp.float32)
            rec_acc[...] += jnp.sum(d * d, axis=0, keepdims=True)

        if p_tiles == grid_t:
            _acc_att()
        else:
            pl.when(i < p_tiles)(_acc_att)

        if r_tiles == grid_t:
            _acc_rec()
        else:
            pl.when(i < r_tiles)(_acc_rec)

        # ---- finalize once: cross-entropy (tiny) + weighted combination ----
        @pl.when(i == grid_t - 1)
        def _finalize():
            lg = logits_ref[...].astype(jnp.float32)          # (N, C)
            n, c = lg.shape
            m = jnp.max(lg, axis=-1, keepdims=True)
            lse = m + jnp.log(jnp.sum(jnp.exp(lg - m), axis=-1, keepdims=True))
            cls = lax.broadcasted_iota(jnp.int32, (n, c), 1)
            onehot = cls == target_ref[...]                   # (N,1) -> (N,C)
            tgt_logit = jnp.sum(jnp.where(onehot, lg, 0.0), axis=-1, keepdims=True)
            ce = jnp.sum(lse - tgt_logit) / jnp.float32(n)    # mean reduction
            # TODO(synk): ignore_index / class weights of CrossEntropyLoss not
            # supported (the module uses the defaults, which this matches).

            latt = jnp.sum(att_acc[...])                      # single cross-lane reduce
            lrec = jnp.sum(rec_acc[...]) / jnp.float32(rec_count)
            out_ref[0, 0] = (jnp.float32(beta) * latt
                             - jnp.float32(gamma) * ce
                             + jnp.float32(sigma) * lrec)

    def _clamped(n_tiles):
        if n_tiles == grid_t:
            return lambda i: (i, 0)
        return lambda i: (jnp.minimum(i, n_tiles - 1), 0)

    itemsize = lambda x: x.size * int(jnp.dtype(x.dtype).itemsize)
    cost = pl.CostEstimate(
        flops=int(pattn2d.size + 3 * reca2d.size + 6 * logits.size),
        transcendentals=int(logits.size + n_batch),
        bytes_accessed=int(itemsize(pattn2d) + itemsize(reca2d) + itemsize(recb2d)
                           + itemsize(logits) + itemsize(target2d) + 4),
    )

    # VMEM budget: 3 streamed inputs x 2 buffers + resident CE blocks + accs.
    streamed = 2 * (p_tile * 128 * int(jnp.dtype(pattn.dtype).itemsize)
                    + 2 * r_tile * 128 * int(jnp.dtype(rec_pred.dtype).itemsize))
    resident = 2 * (itemsize(logits) + itemsize(target2d)) + 4 * 8 * 128 * 4
    vmem_limit = int(min(48 * 2**20, max(32 * 2**20, 2 * (streamed + resident))))

    out = pl.pallas_call(
        kernel,
        out_shape=jax.ShapeDtypeStruct((1, 1), jnp.float32),
        grid=(grid_t,),
        in_specs=[
            # big tensors: tiled, block index clamped to each tensor's last tile
            pl.BlockSpec((p_tile, 128), _clamped(p_tiles)),
            pl.BlockSpec((r_tile, 128), _clamped(r_tiles)),
            pl.BlockSpec((r_tile, 128), _clamped(r_tiles)),
            # small tensors: one constant block (DMA'd once, reused across the grid)
            pl.BlockSpec(logits.shape, lambda i: (0, 0)),
            pl.BlockSpec(target2d.shape, lambda i: (0, 0)),
        ],
        out_specs=pl.BlockSpec(memory_space=pltpu.SMEM),
        scratch_shapes=[pltpu.VMEM((1, 128), jnp.float32),   # attention partials
                        pltpu.VMEM((1, 128), jnp.float32)],  # sq-diff partials
        compiler_params=pltpu.CompilerParams(
            dimension_semantics=("arbitrary",),
            vmem_limit_bytes=vmem_limit,
        ),
        cost_estimate=cost,
    )(pattn2d, reca2d, recb2d, logits, target2d)
    return out[0, 0]


def _reference(logits, pattn, rec_target, rec_pred, target, beta, gamma, sigma):
    """Pure-JAX mirror of the PyTorch forward."""
    latt = jnp.sum(pattn.astype(jnp.float32))
    lg = logits.astype(jnp.float32)
    lse = jax.nn.logsumexp(lg, axis=-1)
    tgt_logit = jnp.take_along_axis(lg, target[:, None].astype(jnp.int32), axis=-1)[:, 0]
    ce = jnp.mean(lse - tgt_logit)
    lrec = jnp.mean((rec_pred.astype(jnp.float32) - rec_target.astype(jnp.float32)) ** 2)
    return beta * latt - gamma * ce + sigma * lrec


if __name__ == "__main__":
    beta, gamma, sigma = 5e-05, 0.005, 1.0
    B, H, S = 2, 4, 16          # output[2]: attention pattern (B, H, S, S)
    N, C = 8, 32                # output[0]: logits (N, C); target: (N,)
    rec_shape = (2, 3, 20, 20)  # output[3] / output[4]: reconstruction pair

    key = jax.random.PRNGKey(0)
    k1, k2, k3, k4, k5 = jax.random.split(key, 5)
    logits = jax.random.normal(k1, (N, C), dtype=jnp.float32)
    pattn = jax.random.uniform(k2, (B, H, S, S), dtype=jnp.float32)
    rec_target = jax.random.normal(k3, rec_shape, dtype=jnp.float32)
    rec_pred = rec_target + 0.1 * jax.random.normal(k4, rec_shape, dtype=jnp.float32)
    target = jax.random.randint(k5, (N,), 0, C, dtype=jnp.int32)

    ref = _reference(logits, pattn, rec_target, rec_pred, target, beta, gamma, sigma)

    # Default tiling (single tile per tensor at these small shapes).
    out = generator_loss3(logits, pattn, rec_target, rec_pred, target,
                          beta=beta, gamma=gamma, sigma=sigma)
    out = jax.block_until_ready(out)
    assert jnp.allclose(out, ref, rtol=1e-5, atol=1e-5), (out, ref)

    # Tiny tiles: exercises the multi-tile grid, index clamping, pl.when gating
    # and the zero-padded (no-mask) ragged paths.
    out_small = generator_loss3(logits, pattn, rec_target, rec_pred, target,
                                beta=beta, gamma=gamma, sigma=sigma,
                                max_tile_rows=8)
    out_small = jax.block_until_ready(out_small)
    assert jnp.allclose(out_small, ref, rtol=1e-5, atol=1e-5), (out_small, ref)

    print("KERNEL_OK")
</pallas_src>

<mosaic_0001>
module attributes {stable_mosaic.version = 11 : i64} {
  func.func @kernel(%arg0: i32, %arg1: memref<16x128xf32, #tpu.memory_space<vmem>>, %arg2: memref<24x128xf32, #tpu.memory_space<vmem>>, %arg3: memref<24x128xf32, #tpu.memory_space<vmem>>, %arg4: memref<8x32xf32, #tpu.memory_space<vmem>>, %arg5: memref<8x1xi32, #tpu.memory_space<vmem>>, %arg6: memref<1x1xf32, #tpu.memory_space<smem>>, %arg7: memref<1x128xf32, #tpu.memory_space<vmem>>, %arg8: memref<1x128xf32, #tpu.memory_space<vmem>>) attributes {dimension_semantics = [#tpu.dimension_semantics<arbitrary>], iteration_bounds = array<i64: 1>, scalar_prefetch = 0 : i64, scratch_operands = 2 : i64, tpu.core_type = #tpu.core_type<tc>, window_params = [{transform_indices = @transform_0, window_bounds = array<i64: 16, 128>}, {transform_indices = @transform_1, window_bounds = array<i64: 24, 128>}, {transform_indices = @transform_2, window_bounds = array<i64: 24, 128>}, {pipeline_mode = #tpu.pipeline_mode<synchronous>, transform_indices = @transform_3, window_bounds = array<i64: 8, 32>}, {pipeline_mode = #tpu.pipeline_mode<synchronous>, transform_indices = @transform_4, window_bounds = array<i64: 8, 1>}, {transform_indices = @transform_5, window_bounds = array<i64: 1, 1>}]} {
    %c0_i32 = arith.constant 0 : i32
    %0 = arith.cmpi eq, %arg0, %c0_i32 : i32
    %1 = arith.extui %0 : i1 to i32
    %c0_i32_0 = arith.constant 0 : i32
    %2 = arith.cmpi ne, %1, %c0_i32_0 : i32
    scf.if %2 {
      %cst_17 = arith.constant 0.000000e+00 : f32
      %21 = vector.broadcast %cst_17 : f32 to vector<1x128xf32>
      %c0_18 = arith.constant 0 : index
      %c0_19 = arith.constant 0 : index
      %22 = vector.load %arg7[%c0_18, %c0_19] : memref<1x128xf32, #tpu.memory_space<vmem>>, vector<1x128xf32>
      tpu.vector_store %arg7[%c0_18, %c0_19], %21 {strides = array<i32>} : memref<1x128xf32, #tpu.memory_space<vmem>>, vector<1x128xf32>,
      %cst_20 = arith.constant 0.000000e+00 : f32
      %23 = vector.broadcast %cst_20 : f32 to vector<1x128xf32>
      %c0_21 = arith.constant 0 : index
      %c0_22 = arith.constant 0 : index
      %24 = vector.load %arg8[%c0_21, %c0_22] : memref<1x128xf32, #tpu.memory_space<vmem>>, vector<1x128xf32>
      tpu.vector_store %arg8[%c0_21, %c0_22], %23 {strides = array<i32>} : memref<1x128xf32, #tpu.memory_space<vmem>>, vector<1x128xf32>,
    } else {
    }
    %c0 = arith.constant 0 : index
    %c0_1 = arith.constant 0 : index
    %3 = vector.load %arg1[%c0, %c0_1] : memref<16x128xf32, #tpu.memory_space<vmem>>, vector<16x128xf32>
    %c0_2 = arith.constant 0 : index
    %c0_3 = arith.constant 0 : index
    %4 = vector.load %arg7[%c0_2, %c0_3] : memref<1x128xf32, #tpu.memory_space<vmem>>, vector<1x128xf32>
    %cst = arith.constant dense<0.000000e+00> : vector<128xf32>
    %5 = vector.multi_reduction <add>, %3, %cst [0] : vector<16x128xf32> to vector<128xf32>
    %6 = vector.shape_cast %5 : vector<128xf32> to vector<1x128xf32>
    %7 = arith.addf %4, %6 : vector<1x128xf32>
    %c0_4 = arith.constant 0 : index
    %c0_5 = arith.constant 0 : index
    %8 = vector.load %arg7[%c0_4, %c0_5] : memref<1x128xf32, #tpu.memory_space<vmem>>, vector<1x128xf32>
    tpu.vector_store %arg7[%c0_4, %c0_5], %7 {strides = array<i32>} : memref<1x128xf32, #tpu.memory_space<vmem>>, vector<1x128xf32>,
    %c0_6 = arith.constant 0 : index
    %c0_7 = arith.constant 0 : index
    %9 = vector.load %arg2[%c0_6, %c0_7] : memref<24x128xf32, #tpu.memory_space<vmem>>, vector<24x128xf32>
    %c0_8 = arith.constant 0 : index
    %c0_9 = arith.constant 0 : index
    %10 = vector.load %arg3[%c0_8, %c0_9] : memref<24x128xf32, #tpu.memory_space<vmem>>, vector<24x128xf32>
    %11 = arith.subf %9, %10 : vector<24x128xf32>
    %c0_10 = arith.constant 0 : index
    %c0_11 = arith.constant 0 : index
    %12 = vector.load %arg8[%c0_10, %c0_11] : memref<1x128xf32, #tpu.memory_space<vmem>>, vector<1x128xf32>
    %13 = arith.mulf %11, %11 : vector<24x128xf32>
    %cst_12 = arith.constant dense<0.000000e+00> : vector<128xf32>
    %14 = vector.multi_reduction <add>, %13, %cst_12 [0] : vector<24x128xf32> to vector<128xf32>
    %15 = vector.shape_cast %14 : vector<128xf32> to vector<1x128xf32>
    %16 = arith.addf %12, %15 : vector<1x128xf32>
    %c0_13 = arith.constant 0 : index
    %c0_14 = arith.constant 0 : index
    %17 = vector.load %arg8[%c0_13, %c0_14] : memref<1x128xf32, #tpu.memory_space<vmem>>, vector<1x128xf32>
    tpu.vector_store %arg8[%c0_13, %c0_14], %16 {strides = array<i32>} : memref<1x128xf32, #tpu.memory_space<vmem>>, vector<1x128xf32>,
    %c0_i32_15 = arith.constant 0 : i32
    %18 = arith.cmpi eq, %arg0, %c0_i32_15 : i32
    %19 = arith.extui %18 : i1 to i32
    %c0_i32_16 = arith.constant 0 : i32
    %20 = arith.cmpi ne, %19, %c0_i32_16 : i32
    scf.if %20 {
      %c0_17 = arith.constant 0 : index
      %c0_18 = arith.constant 0 : index
      %21 = vector.load %arg4[%c0_17, %c0_18] : memref<8x32xf32, #tpu.memory_space<vmem>>, vector<8x32xf32>
      %cst_19 = arith.constant dense<0xFF800000> : vector<8xf32>
      %22 = vector.multi_reduction <maximumf>, %21, %cst_19 [1] : vector<8x32xf32> to vector<8xf32>
      %23 = vector.shape_cast %22 : vector<8xf32> to vector<8x1xf32>
      %24 = vector.broadcast %23 : vector<8x1xf32> to vector<8x32xf32>
      %25 = arith.subf %21, %24 : vector<8x32xf32>
      %26 = math.exp %25 : vector<8x32xf32>
      %cst_20 = arith.constant dense<0.000000e+00> : vector<8xf32>
      %27 = vector.multi_reduction <add>, %26, %cst_20 [1] : vector<8x32xf32> to vector<8xf32>
      %28 = vector.shape_cast %27 : vector<8xf32> to vector<8x1xf32>
      %29 = math.log %28 : vector<8x1xf32>
      %30 = arith.addf %23, %29 : vector<8x1xf32>
      %31 = tpu.iota {dimensions = array<i32: 1>} : vector<8x32xi32>
      %c0_21 = arith.constant 0 : index
      %c0_22 = arith.constant 0 : index
      %32 = vector.load %arg5[%c0_21, %c0_22] : memref<8x1xi32, #tpu.memory_space<vmem>>, vector<8x1xi32>
      %33 = vector.broadcast %32 : vector<8x1xi32> to vector<8x32xi32>
      %34 = arith.cmpi eq, %31, %33 : vector<8x32xi32>
      %cst_23 = arith.constant 0.000000e+00 : f32
      %35 = vector.broadcast %cst_23 : f32 to vector<8x32xf32>
      %36 = arith.select %34, %21, %35 : vector<8x32xi1>, vector<8x32xf32>
      %cst_24 = arith.constant dense<0.000000e+00> : vector<8xf32>
      %37 = vector.multi_reduction <add>, %36, %cst_24 [1] : vector<8x32xf32> to vector<8xf32>
      %38 = vector.shape_cast %37 : vector<8xf32> to vector<8x1xf32>
      %39 = arith.subf %30, %38 : vector<8x1xf32>
      %40 = vector.shape_cast %39 : vector<8x1xf32> to vector<1x8x1xf32>
      %cst_25 = arith.constant dense<0.000000e+00> : vector<1xf32>
      %41 = vector.multi_reduction <add>, %40, %cst_25 [1, 2] : vector<1x8x1xf32> to vector<1xf32>
      %42 = vector.shape_cast %41 : vector<1xf32> to vector<1x1x1xf32>
      %43 = vector.extract %42[0, 0, 0] : f32 from vector<1x1x1xf32>
      %cst_26 = arith.constant 8.000000e+00 : f32
      %44 = arith.divf %43, %cst_26 : f32
      %c0_27 = arith.constant 0 : index
      %c0_28 = arith.constant 0 : index
      %45 = vector.load %arg7[%c0_27, %c0_28] : memref<1x128xf32, #tpu.memory_space<vmem>>, vector<1x128xf32>
      %46 = vector.shape_cast %45 : vector<1x128xf32> to vector<1x1x128xf32>
      %cst_29 = arith.constant dense<0.000000e+00> : vector<1xf32>
      %47 = vector.multi_reduction <add>, %46, %cst_29 [1, 2] : vector<1x1x128xf32> to vector<1xf32>
      %48 = vector.shape_cast %47 : vector<1xf32> to vector<1x1x1xf32>
      %49 = vector.extract %48[0, 0, 0] : f32 from vector<1x1x1xf32>
      %c0_30 = arith.constant 0 : index
      %c0_31 = arith.constant 0 : index
      %50 = vector.load %arg8[%c0_30, %c0_31] : memref<1x128xf32, #tpu.memory_space<vmem>>, vector<1x128xf32>
      %51 = vector.shape_cast %50 : vector<1x128xf32> to vector<1x1x128xf32>
      %cst_32 = arith.constant dense<0.000000e+00> : vector<1xf32>
      %52 = vector.multi_reduction <add>, %51, %cst_32 [1, 2] : vector<1x1x128xf32> to vector<1xf32>
      %53 = vector.shape_cast %52 : vector<1xf32> to vector<1x1x1xf32>
      %54 = vector.extract %53[0, 0, 0] : f32 from vector<1x1x1xf32>
      %cst_33 = arith.constant 2.400000e+03 : f32
      %55 = arith.divf %54, %cst_33 : f32
      %cst_34 = arith.constant 5.000000e-05 : f32
      %56 = arith.mulf %cst_34, %49 : f32
      %cst_35 = arith.constant 5.000000e-03 : f32
      %57 = arith.mulf %cst_35, %44 : f32
      %58 = arith.subf %56, %57 : f32
      %cst_36 = arith.constant 1.000000e+00 : f32
      %59 = arith.mulf %cst_36, %55 : f32
      %60 = arith.addf %58, %59 : f32
      %c0_37 = arith.constant 0 : index
      %c0_38 = arith.constant 0 : index
      %61 = memref.load %arg6[%c0_37, %c0_38] : memref<1x1xf32, #tpu.memory_space<smem>>
      memref.store %60, %arg6[%c0_37, %c0_38] : memref<1x1xf32, #tpu.memory_space<smem>>
    } else {
    }
    return
  }
  func.func @transform_0(%arg0: i32) -> (i32, i32) {
    %c0_i32 = arith.constant 0 : i32
    %c0_i32_0 = arith.constant 0 : i32
    return %arg0, %c0_i32 : i32, i32
  }
  func.func @transform_1(%arg0: i32) -> (i32, i32) {
    %c0_i32 = arith.constant 0 : i32
    %c0_i32_0 = arith.constant 0 : i32
    return %arg0, %c0_i32 : i32, i32
  }
  func.func @transform_2(%arg0: i32) -> (i32, i32) {
    %c0_i32 = arith.constant 0 : i32
    %c0_i32_0 = arith.constant 0 : i32
    return %arg0, %c0_i32 : i32, i32
  }
  func.func @transform_3(%arg0: i32) -> (i32, i32) {
    %c0_i32 = arith.constant 0 : i32
    %c0_i32_0 = arith.constant 0 : i32
    %c0_i32_1 = arith.constant 0 : i32
    return %c0_i32, %c0_i32_0 : i32, i32
  }
  func.func @transform_4(%arg0: i32) -> (i32, i32) {
    %c0_i32 = arith.constant 0 : i32
    %c0_i32_0 = arith.constant 0 : i32
    %c0_i32_1 = arith.constant 0 : i32
    return %c0_i32, %c0_i32_0 : i32, i32
  }
  func.func @transform_5(%arg0: i32) -> (i32, i32) {
    %c0_i32 = arith.constant 0 : i32
    %c0_i32_0 = arith.constant 0 : i32
    %c0_i32_1 = arith.constant 0 : i32
    return %c0_i32, %c0_i32_0 : i32, i32
  }
}

</mosaic_0001>

<llo_original>
// kernel: tpu_custom_call.1
$region0: #{tpu_custom_call.1}
  #allocation0 [shape = 'u32[]', space=smem, size = 0x4, offset = 0x4, fixed_abs, tag = 'smem constant byte address 0x4 - core index']
  #allocation1 [shape = 'u32[144,128]{1,0:T(1,128)}', space=vmem, size = 0x12000, scoped, tag = 'internal scratch']
  #allocation2 [shape = 'f32[1,128]{1,0:T(1,128)}', space=vmem, size = 0x200, scoped, tag = 'scratch operand']
  #allocation3 [shape = 'f32[1,128]{1,0:T(1,128)}', space=vmem, size = 0x200, scoped, tag = 'scratch operand']
  %s0 = inlined_call_operand.hbm [shape: f32[16,128], index: 0, kind: input, shape index: {}]
  %s1 = inlined_call_operand.hbm [shape: f32[24,128], index: 1, kind: input, shape index: {}]
  %s2 = inlined_call_operand.hbm [shape: f32[24,128], index: 2, kind: input, shape index: {}]
  %s3 = inlined_call_operand.vmem [shape: f32[8,32], index: 3, kind: input, shape index: {}]
  %s4 = inlined_call_operand.vmem [shape: s32[8,1], index: 4, kind: input, shape index: {}]
  %s5 = inlined_call_operand.hbm [shape: f32[1,1], index: 5, kind: output, shape index: {}]
  %s6 = sld [smem:[#allocation0]]
  $region50: #{tpu_custom_call.1} parent=0
    _
  %s8 = ssub.s32 1, %s6
  %s9 = scalar_select 0, %s8, %s6
  $region1: #{tpu_custom_call.1} parent=0
    #allocation4 [shape = 'u8[8192]{0}', space=vmem, size = 0x2000, scoped, tag = 'input window, operand 0, single buffered']
    #allocation5 [shape = 's32[1]{0}', space=sflag, size = 0x4, scoped, tag = 'scoped memory for tpu_custom_call.1']
    #allocation6 [shape = 's32[1]{0}', space=sflag, size = 0x4, scoped, tag = 'scoped memory for tpu_custom_call.1']
    #allocation7 [shape = 'u8[12288]{0}', space=vmem, size = 0x3000, scoped, tag = 'input window, operand 1, single buffered']
    #allocation8 [shape = 's32[1]{0}', space=sflag, size = 0x4, scoped, tag = 'scoped memory for tpu_custom_call.1']
    #allocation9 [shape = 'u8[12288]{0}', space=vmem, size = 0x3000, scoped, tag = 'input window, operand 2, single buffered']
    #allocation10 [shape = 'u8[512]{0}', space=smem, size = 0x200, scoped, tag = 'output window, operand 0, single buffered']
    %10 = vsyncpa [#allocation5], 0
    %11 = vsyncpa [#allocation8], 0
    %12 = vsyncpa [#allocation6], 0
    // Predicated region
    $region2: #{tpu_custom_call.1} parent=1 // pred_check
      _
    $region3: #{tpu_custom_call.1} parent=1 // pred_check_branch
      %14 = sbr.rel (0) target = $region5
    $region4: #{tpu_custom_call.1} parent=1 // pred_region
      %s16 = ssub.s32 256, 256
      %17 = vsyncadd [#allocation5], %s16
      %s18 = sshll.u32 [#allocation4], 4
      %s19 = int_to_ptr.vmem [resolvable:$true] %s18
      %24 = dma.hbm_to_vmem [thread:$0]  %s0, 256, %s19, [#allocation5], 128, 128, 8
    $region5: #{tpu_custom_call.1} parent=1 // pred_fallthru
      _
    // Predicated region
    $region6: #{tpu_custom_call.1} parent=1 // pred_check
      _
    $region7: #{tpu_custom_call.1} parent=1 // pred_check_branch
      %26 = sbr.rel (0) target = $region9
    $region8: #{tpu_custom_call.1} parent=1 // pred_region
      %s28 = ssub.s32 384, 384
      %29 = vsyncadd [#allocation8], %s28
      %s30 = sshll.u32 [#allocation7], 4
      %s31 = int_to_ptr.vmem [resolvable:$true] %s30
      %36 = dma.hbm_to_vmem [thread:$0]  %s1, 384, %s31, [#allocation8], 128, 128, 8
    $region9: #{tpu_custom_call.1} parent=1 // pred_fallthru
      _
    // Predicated region
    $region10: #{tpu_custom_call.1} parent=1 // pred_check
      _
    $region11: #{tpu_custom_call.1} parent=1 // pred_check_branch
      %38 = sbr.rel (0) target = $region13
    $region12: #{tpu_custom_call.1} parent=1 // pred_region
      %s40 = ssub.s32 384, 384
      %41 = vsyncadd [#allocation8], %s40
      %s42 = sshll.u32 [#allocation9], 4
      %s43 = int_to_ptr.vmem [resolvable:$true] %s42
      %48 = dma.hbm_to_vmem [thread:$0]  %s2, 384, %s43, [#allocation8], 128, 128, 8
    $region13: #{tpu_custom_call.1} parent=1 // pred_fallthru
      _
    // Predicated region
    $region14: #{tpu_custom_call.1} parent=1 // pred_check
      _
    $region15: #{tpu_custom_call.1} parent=1 // pred_check_branch
      %50 = sbr.rel (0) target = $region17
    $region16: #{tpu_custom_call.1} parent=1 // pred_region
      _
    $region17: #{tpu_custom_call.1} parent=1 // pred_fallthru
      _
    // Predicated region
    $region18: #{tpu_custom_call.1} parent=1 // pred_check
      _
    $region19: #{tpu_custom_call.1} parent=1 // pred_check_branch
      %52 = sbr.rel (0) target = $region21
    $region20: #{tpu_custom_call.1} parent=1 // pred_region
      _
    $region21: #{tpu_custom_call.1} parent=1 // pred_fallthru
      _
    // Predicated region
    $region22: #{tpu_custom_call.1} parent=1 // pred_check
      _
    $region23: #{tpu_custom_call.1} parent=1 // pred_check_branch
      %54 = sbr.rel (0) target = $region25
    $region24: #{tpu_custom_call.1} parent=1 // pred_region
      %55 = dma.done [#allocation5], 256
    $region25: #{tpu_custom_call.1} parent=1 // pred_fallthru
      _
    // Predicated region
    $region26: #{tpu_custom_call.1} parent=1 // pred_check
      _
    $region27: #{tpu_custom_call.1} parent=1 // pred_check_branch
      %57 = sbr.rel (0) target = $region29
    $region28: #{tpu_custom_call.1} parent=1 // pred_region
      %58 = dma.done [#allocation8], 384
    $region29: #{tpu_custom_call.1} parent=1 // pred_fallthru
      _
    // Predicated region
    $region30: #{tpu_custom_call.1} parent=1 // pred_check
      _
    $region31: #{tpu_custom_call.1} parent=1 // pred_check_branch
      %60 = sbr.rel (0) target = $region33
    $region32: #{tpu_custom_call.1} parent=1 // pred_region
      %61 = dma.done [#allocation8], 384
    $region33: #{tpu_custom_call.1} parent=1 // pred_fallthru
      _
    %p62 = scmp.eq.s32.totalorder 0, 0
    // Predicated region
    $region34: #{tpu_custom_call.1} parent=1 // pred_check
      %p63 = pneg %p62
    $region35: #{tpu_custom_call.1} parent=1 // pred_check_branch
      %65 = sbr.rel (%p63) target = $region37
    $region36: #{tpu_custom_call.1} parent=1 // pred_region
      %66 = vst [vmem:[#allocation2] sm:$0x1] 0.0
      %67 = vst [vmem:[#allocation3] sm:$0x1] 0.0
    $region37: #{tpu_custom_call.1} parent=1 // pred_fallthru
      _
    %v68 = vld [vmem:[#allocation4] sm:$0xff]
    %v69 = vld [vmem:[#allocation4 + $0x8] sm:$0xff]
    %v70 = vld [vmem:[#allocation2] sm:$0x1]
    %v71 = vadd.f32 %v68, %v69
    %v72 = vrot.slane %v71, 4
    %v73 = vadd.f32 %v71, %v72
    %v74 = vrot.slane %v73, 2
    %v75 = vadd.f32 %v73, %v74
    %v76 = vrot.slane %v75, 1
    %v77 = vadd.f32 %v75, %v76
    %v78 = vadd.f32 %v70, %v77
    %79 = vst [vmem:[#allocation2] sm:$0x1] %v78
    %v80 = vld [vmem:[#allocation7] sm:$0xff]
    %v81 = vld [vmem:[#allocation7 + $0x8] sm:$0xff]
    %v82 = vld [vmem:[#allocation7 + $0x10] sm:$0xff]
    %v83 = vld [vmem:[#allocation9] sm:$0xff]
    %v84 = vld [vmem:[#allocation9 + $0x8] sm:$0xff]
    %v85 = vld [vmem:[#allocation9 + $0x10] sm:$0xff]
    %v86 = vsub.f32 %v80, %v83
    %v87 = vsub.f32 %v81, %v84
    %v88 = vsub.f32 %v82, %v85
    %v89 = vld [vmem:[#allocation3] sm:$0x1]
    %v90 = vmul.f32 %v86, %v86
    %v91 = vmul.f32 %v87, %v87
    %v92 = vmul.f32 %v88, %v88
    %v93 = vadd.f32 %v90, %v91
    %v94 = vadd.f32 %v93, %v92
    %v95 = vrot.slane %v94, 4
    %v96 = vadd.f32 %v94, %v95
    %v97 = vrot.slane %v96, 2
    %v98 = vadd.f32 %v96, %v97
    %v99 = vrot.slane %v98, 1
    %v100 = vadd.f32 %v98, %v99
    %v101 = vadd.f32 %v89, %v100
    %102 = vst [vmem:[#allocation3] sm:$0x1] %v101
    // Predicated region
    $region38: #{tpu_custom_call.1} parent=1 // pred_check
      %p103 = pneg %p62
    $region39: #{tpu_custom_call.1} parent=1 // pred_check_branch
      %105 = sbr.rel (%p103) target = $region41
    $region40: #{tpu_custom_call.1} parent=1 // pred_region
      %v106 = vld [vmem:[%s3] sm:$0xff]
      %vm107 = vcmask 261120
      %v108 = vsel %vm107, %v106, -inf
      %109 = vmax.xlane.f32.xlu0 %v108
      %v110 = vpop.xlane.xlu0 %109
      %v111 = vsub.f32 %v106, %v110
      %v112 = vmul.f32 %v111, 1.442695
      %v113 = vpow.pop %v112
      %v114 = vsel %vm107, %v113, 0.0
      %115 = vadd.xlane.f32.xlu0 %v114
      %v116 = vpop.xlane.xlu0 %115
      %v117 = vlog2.pop %v116
      %v118 = vmul.f32 %v117, 0.6931472
      %v119 = vadd.f32 %v110, %v118
      %v120 = vlaneseq
      %v121 = vand.u32 %v120, 127
      %v122 = vld [vmem:[%s4] sm:$0xff]
      %123 = vset.pattern.permute.xlu0 0
      %124 = vperm.xlu0 %123, %v122
      %v125 = vpop.permute.xlu0 %124
      %vm126 = vcmp.eq.s32.totalorder %v121, %v125
      %v127 = vsel %vm126, %v106, 0.0
      %v128 = vsel %vm107, %v127, 0.0
      %129 = vadd.xlane.f32.xlu0 %v128
      %v130 = vpop.xlane.xlu0 %129
      %v131 = vsub.f32 %v119, %v130
      %vm132 = vcmask 7168
      %v133 = vsel %vm132, %v131, 0.0
      %134 = vadd.xlane.f32.xlu0 %v133
      %v135 = vpop.xlane.xlu0 %134
      %v136 = vrot.slane %v135, 4
      %v137 = vadd.f32 %v135, %v136
      %v138 = vrot.slane %v137, 2
      %v139 = vadd.f32 %v137, %v138
      %v140 = vrot.slane %v139, 1
      %v141 = vadd.f32 %v139, %v140
      %s142 = vtos %v141
      %v143 = vrcp.pop 8.0
      %s144 = vtos %v143
      %s145 = smul.f32 %s142, %s144
      %v146 = vld [vmem:[#allocation2] sm:$0x1]
      %vm147 = vcmask 1040384
      %v148 = vsel %vm147, %v146, 0.0
      %149 = vadd.xlane.f32.xlu0 %v148
      %v150 = vpop.xlane.xlu0 %149
      %v151 = vrot.slane %v150, 4
      %v152 = vadd.f32 %v150, %v151
      %v153 = vrot.slane %v152, 2
      %v154 = vadd.f32 %v152, %v153
      %v155 = vrot.slane %v154, 1
      %v156 = vadd.f32 %v154, %v155
      %s157 = vtos %v156
      %v158 = vld [vmem:[#allocation3] sm:$0x1]
      %v159 = vsel %vm147, %v158, 0.0
      %160 = vadd.xlane.f32.xlu0 %v159
      %v161 = vpop.xlane.xlu0 %160
      %v162 = vrot.slane %v161, 4
      %v163 = vadd.f32 %v161, %v162
      %v164 = vrot.slane %v163, 2
      %v165 = vadd.f32 %v163, %v164
      %v166 = vrot.slane %v165, 1
      %v167 = vadd.f32 %v165, %v166
      %s168 = vtos %v167
      %v169 = vrcp.pop 2400.0
      %s170 = vtos %v169
      %s171 = smul.f32 %s168, %s170
      %s172 = smul.f32 %s157, 5e-05
      %s173 = smul.f32 %s145, 0.005
      %s174 = ssub.f32 %s172, %s173
      %s175 = sadd.f32 %s174, %s171
      %s176 = scalar_lea.smem [#allocation10], 0
      %177 = sst [smem:[%s176]] %s175
    $region41: #{tpu_custom_call.1} parent=1 // pred_fallthru
      _
    // Predicated region
    $region42: #{tpu_custom_call.1} parent=1 // pred_check
      _
    $region43: #{tpu_custom_call.1} parent=1 // pred_check_branch
      %179 = sbr.rel (0) target = $region45
    $region44: #{tpu_custom_call.1} parent=1 // pred_region
      %s181 = ssub.s32 16, 16
      %182 = vsyncadd [#allocation6], %s181
      %185 = dma.smem_to_hbm [#allocation10], 16, %s5, [#allocation6]
    $region45: #{tpu_custom_call.1} parent=1 // pred_fallthru
      _
    // Predicated region
    $region46: #{tpu_custom_call.1} parent=1 // pred_check
      _
    $region47: #{tpu_custom_call.1} parent=1 // pred_check_branch
      %187 = sbr.rel (0) target = $region49
    $region48: #{tpu_custom_call.1} parent=1 // pred_region
      %188 = dma.done [#allocation6], 16
    $region49: #{tpu_custom_call.1} parent=1 // pred_fallthru
      _
    %189 = sfence
    %190 = vsyncpa [#allocation5], 1
    %191 = vsyncpa [#allocation8], 1
    %192 = vsyncpa [#allocation6], 1

</llo_original>
